<compile_context>
chip_gen: v5e
topology: v5e:2x2
jax: 0.10.0
libtpu: 0.0.40
codegen_flags: <defaults>
</compile_context>

<pallas_src>
import functools

import jax
import jax.numpy as jnp
from jax.experimental import pallas as pl
from jax.experimental.pallas import tpu as pltpu


# ----------------------------------------------------------------------------
# Kernels
# ----------------------------------------------------------------------------
def _reparam_kernel(mu_ref, var_ref, rand_ref, out_ref, *, A):
    # mu_ref/var_ref: (TB, L)   rand_ref/out_ref: (TB, A*L)
    sigma = jnp.sqrt(var_ref[...])                              # (TB, L)
    mu_t = jnp.concatenate([mu_ref[...]] * A, axis=-1)          # (TB, A*L)
    sg_t = jnp.concatenate([sigma] * A, axis=-1)                # (TB, A*L)
    out_ref[...] = mu_t + rand_ref[...] * sg_t


def _reparam_antithetic_kernel(mu_ref, var_ref, rand_ref, out_ref, *, A, L):
    # rand_ref holds only the A//2 positive draws per row: (TB, (A//2)*L).
    # The +/- interleave of torch.stack([r, -r], dim=1) is rebuilt with static
    # lane slices (XLU/VPU work is free in this memory-bound regime).
    sigma = jnp.sqrt(var_ref[...])                              # (TB, L)
    mu_t = jnp.concatenate([mu_ref[...]] * A, axis=-1)          # (TB, A*L)
    sg_t = jnp.concatenate([sigma] * A, axis=-1)                # (TB, A*L)
    r = rand_ref[...]
    segs = []
    for j in range(A // 2):
        rj = r[:, j * L:(j + 1) * L]
        segs.append(rj)
        segs.append(-rj)
    rand_full = jnp.concatenate(segs, axis=-1)                  # (TB, A*L)
    out_ref[...] = mu_t + rand_full * sg_t


# ----------------------------------------------------------------------------
# Wrapper
# ----------------------------------------------------------------------------
_TARGET_BLOCK_BYTES = 2 * 1024 * 1024   # ~2 MiB rand/out blocks: double-buffered
                                        # total stays well under every chip's
                                        # scoped-VMEM default (16/32 MiB).
_SMALL_FALLBACK_BYTES = 128 * 1024      # below this, plain XLA elementwise wins.


def _pick_tb(B, row_bytes, itemsize):
    """Rows per grid step: ~TARGET_BLOCK_BYTES, sublane-aligned, >=2 grid steps."""
    sub = 8 if itemsize >= 4 else (16 if itemsize == 2 else 32)
    if B <= sub:
        return B                                        # full-dim block: always legal
    tb = max(sub, min(B, _TARGET_BLOCK_BYTES // max(row_bytes, 1)))
    if B >= 2 * sub:
        # Keep at least two grid steps so v7x's two TensorCores both get work.
        tb = min(tb, max(sub, (B // 2) // sub * sub))
    return (tb // sub) * sub


def reparameterize_pallas(mu, var, rand, train_augmentation, antithetic=False):
    """latent = repeat_interleave(mu, A, 0) + rand * sqrt(repeat_interleave(var, A, 0)).

    `rand` is (B*A, L) when antithetic=False, and (B*A//2, L) when True (the
    +/- mirroring of torch.stack([r, -r], 1) is done inside the kernel).
    """
    B, L = mu.shape
    A = int(train_augmentation)
    dtype = mu.dtype
    itemsize = jnp.dtype(dtype).itemsize
    out_bytes = B * A * L * itemsize

    # Tiny problems: pallas_call launch overhead exceeds one fused XLA op.
    if out_bytes < _SMALL_FALLBACK_BYTES:
        if antithetic:
            rand = jnp.stack([rand, -rand], axis=1).reshape(-1, L)
        lat = mu[:, None, :] + rand.reshape(B, A, L) * jnp.sqrt(var)[:, None, :]
        return lat.reshape(B * A, L)

    rand_cols = (A // 2 if antithetic else A) * L
    rand2 = rand.reshape(B, rand_cols)        # contiguous row-major: free view

    row_bytes = A * L * itemsize
    tb = _pick_tb(B, row_bytes, itemsize)
    grid = (pl.cdiv(B, tb),)

    if antithetic:
        kernel = functools.partial(_reparam_antithetic_kernel, A=A, L=L)
    else:
        kernel = functools.partial(_reparam_kernel, A=A)

    out = pl.pallas_call(
        kernel,
        out_shape=jax.ShapeDtypeStruct((B, A * L), dtype),
        grid_spec=pltpu.PrefetchScalarGridSpec(
            num_scalar_prefetch=0,
            grid=grid,
            in_specs=[
                pl.BlockSpec((tb, L), lambda i: (i, 0)),          # mu
                pl.BlockSpec((tb, L), lambda i: (i, 0)),          # var
                pl.BlockSpec((tb, rand_cols), lambda i: (i, 0)),  # rand
            ],
            out_specs=pl.BlockSpec((tb, A * L), lambda i: (i, 0)),
        ),
        compiler_params=pltpu.CompilerParams(
            dimension_semantics=("parallel",),
            vmem_limit_bytes=32 * 1024 * 1024,   # explicit, safe on v5e/v6e/v7x
        ),
    )(mu, var, rand2)
    return out.reshape(B * A, L)


class VAE2:
    """JAX/Pallas port of the PyTorch VAE2 module.

    The original module holds only a zero-sized `_device_param` used to track
    the device; it contributes nothing to the computation, so no parameters
    are materialized here.
    """

    def __init__(self):
        self.training = True  # mirrors nn.Module.training

    def __call__(self, mode='train', mu=None, var=None, train_augmentation=1,
                 train_sample_opposite=False, latent_size=None, batch_size=None,
                 rng=None):
        if mode == 'generate':
            # torch.randn(batch_size, latent_size): pure sampling, no tensor math.
            return jax.random.normal(rng, (batch_size, latent_size), dtype=jnp.float32)

        if self.training:
            B, L = mu.shape
            A = int(train_augmentation)
            if train_sample_opposite:
                assert A % 2 == 0
                r = jax.random.normal(rng, (B * A // 2, L), dtype=mu.dtype)
                return reparameterize_pallas(mu, var, r, A, antithetic=True)
            else:
                rand = jax.random.normal(rng, (B * A, L), dtype=mu.dtype)
                return reparameterize_pallas(mu, var, rand, A, antithetic=False)
        else:
            # eval mode: latent = mu (identity; no kernel needed)
            return mu


if __name__ == "__main__":
    key = jax.random.PRNGKey(0)
    k_mu, k_var, k_r1, k_r2, k_mu2, k_var2, k_r3, k_r4, k_gen = jax.random.split(key, 9)

    vae = VAE2()

    # ------------------------------------------------------------------
    # Tiny shape (B=2, A=4, L=32): exercises the small-problem fallback.
    # ------------------------------------------------------------------
    B, L, A = 2, 32, 4
    mu = jax.random.normal(k_mu, (B, L), dtype=jnp.float32)
    var = jax.nn.softplus(jax.random.normal(k_var, (B, L), dtype=jnp.float32)) + 1e-3

    latent = vae(mode='train', mu=mu, var=var, train_augmentation=A,
                 train_sample_opposite=False, rng=k_r1)
    jax.block_until_ready(latent)
    assert latent.shape == (B * A, L)
    rand_ref = jax.random.normal(k_r1, (B * A, L), dtype=jnp.float32)
    ref = jnp.repeat(mu, A, axis=0) + rand_ref * jnp.sqrt(jnp.repeat(var, A, axis=0))
    assert jnp.allclose(latent, ref, atol=1e-5, rtol=1e-5)

    # ------------------------------------------------------------------
    # Moderate shape (B=64, A=8, L=128): exercises the Pallas kernel path
    # (lane-dense folded layout, TB=32 rows per step, 2 grid steps).
    # ------------------------------------------------------------------
    B2, L2, A2 = 64, 128, 8
    mu2 = jax.random.normal(k_mu2, (B2, L2), dtype=jnp.float32)
    var2 = jax.nn.softplus(jax.random.normal(k_var2, (B2, L2), dtype=jnp.float32)) + 1e-3

    latent2 = vae(mode='train', mu=mu2, var=var2, train_augmentation=A2,
                  train_sample_opposite=False, rng=k_r3)
    jax.block_until_ready(latent2)
    assert latent2.shape == (B2 * A2, L2)
    rand2_ref = jax.random.normal(k_r3, (B2 * A2, L2), dtype=jnp.float32)
    ref2 = jnp.repeat(mu2, A2, axis=0) + rand2_ref * jnp.sqrt(jnp.repeat(var2, A2, axis=0))
    assert jnp.allclose(latent2, ref2, atol=1e-5, rtol=1e-5)

    # --- antithetic (train_sample_opposite=True) on the Pallas path ---
    latent3 = vae(mode='train', mu=mu2, var=var2, train_augmentation=A2,
                  train_sample_opposite=True, rng=k_r4)
    jax.block_until_ready(latent3)
    assert latent3.shape == (B2 * A2, L2)
    r3 = jax.random.normal(k_r4, (B2 * A2 // 2, L2), dtype=jnp.float32)
    rand3_ref = jnp.stack([r3, -r3], axis=1).reshape(-1, L2)
    ref3 = jnp.repeat(mu2, A2, axis=0) + rand3_ref * jnp.sqrt(jnp.repeat(var2, A2, axis=0))
    assert jnp.allclose(latent3, ref3, atol=1e-5, rtol=1e-5)

    # --- antithetic on the tiny fallback path ---
    latent_op = vae(mode='train', mu=mu, var=var, train_augmentation=A,
                    train_sample_opposite=True, rng=k_r2)
    jax.block_until_ready(latent_op)
    r_small = jax.random.normal(k_r2, (B * A // 2, L), dtype=jnp.float32)
    rand_op = jnp.stack([r_small, -r_small], axis=1).reshape(-1, L)
    ref_op = jnp.repeat(mu, A, axis=0) + rand_op * jnp.sqrt(jnp.repeat(var, A, axis=0))
    assert jnp.allclose(latent_op, ref_op, atol=1e-5, rtol=1e-5)

    # --- eval mode: identity on mu ---
    vae.training = False
    latent_eval = vae(mode='train', mu=mu, var=var)
    assert jnp.allclose(latent_eval, mu)
    vae.training = True

    # --- generate mode: randn(batch_size, latent_size) ---
    gen = vae(mode='generate', batch_size=B, latent_size=L, rng=k_gen)
    jax.block_until_ready(gen)
    assert gen.shape == (B, L)

    print("KERNEL_OK")
</pallas_src>

<mosaic_0001>
module attributes {stable_mosaic.version = 11 : i64} {
  func.func @_reparam_kernel(%arg0: i32, %arg1: memref<32x128xf32, #tpu.memory_space<vmem>>, %arg2: memref<32x128xf32, #tpu.memory_space<vmem>>, %arg3: memref<32x1024xf32, #tpu.memory_space<vmem>>, %arg4: memref<32x1024xf32, #tpu.memory_space<vmem>>) attributes {dimension_semantics = [#tpu.dimension_semantics<parallel>], iteration_bounds = array<i64: 2>, scalar_prefetch = 0 : i64, scratch_operands = 0 : i64, tpu.core_type = #tpu.core_type<tc>, window_params = [{transform_indices = @transform_0, window_bounds = array<i64: 32, 128>}, {transform_indices = @transform_1, window_bounds = array<i64: 32, 128>}, {transform_indices = @transform_2, window_bounds = array<i64: 32, 1024>}, {transform_indices = @transform_3, window_bounds = array<i64: 32, 1024>}]} {
    %c0 = arith.constant 0 : index
    %c0_0 = arith.constant 0 : index
    %0 = vector.load %arg2[%c0, %c0_0] : memref<32x128xf32, #tpu.memory_space<vmem>>, vector<32x128xf32>
    %1 = math.sqrt %0 : vector<32x128xf32>
    %c0_1 = arith.constant 0 : index
    %c0_2 = arith.constant 0 : index
    %2 = vector.load %arg1[%c0_1, %c0_2] : memref<32x128xf32, #tpu.memory_space<vmem>>, vector<32x128xf32>
    %3 = tpu.concatenate %2, %2, %2, %2, %2, %2, %2, %2 in 1 : vector<32x128xf32>, vector<32x128xf32>, vector<32x128xf32>, vector<32x128xf32>, vector<32x128xf32>, vector<32x128xf32>, vector<32x128xf32>, vector<32x128xf32> -> vector<32x1024xf32>
    %4 = tpu.concatenate %1, %1, %1, %1, %1, %1, %1, %1 in 1 : vector<32x128xf32>, vector<32x128xf32>, vector<32x128xf32>, vector<32x128xf32>, vector<32x128xf32>, vector<32x128xf32>, vector<32x128xf32>, vector<32x128xf32> -> vector<32x1024xf32>
    %c0_3 = arith.constant 0 : index
    %c0_4 = arith.constant 0 : index
    %5 = vector.load %arg3[%c0_3, %c0_4] : memref<32x1024xf32, #tpu.memory_space<vmem>>, vector<32x1024xf32>
    %6 = arith.mulf %5, %4 : vector<32x1024xf32>
    %7 = arith.addf %3, %6 : vector<32x1024xf32>
    %c0_5 = arith.constant 0 : index
    %c0_6 = arith.constant 0 : index
    %8 = vector.load %arg4[%c0_5, %c0_6] : memref<32x1024xf32, #tpu.memory_space<vmem>>, vector<32x1024xf32>
    tpu.vector_store %arg4[%c0_5, %c0_6], %7 {strides = array<i32>} : memref<32x1024xf32, #tpu.memory_space<vmem>>, vector<32x1024xf32>,
    return
  }
  func.func @transform_0(%arg0: i32) -> (i32, i32) {
    %c0_i32 = arith.constant 0 : i32
    %c0_i32_0 = arith.constant 0 : i32
    return %arg0, %c0_i32 : i32, i32
  }
  func.func @transform_1(%arg0: i32) -> (i32, i32) {
    %c0_i32 = arith.constant 0 : i32
    %c0_i32_0 = arith.constant 0 : i32
    return %arg0, %c0_i32 : i32, i32
  }
  func.func @transform_2(%arg0: i32) -> (i32, i32) {
    %c0_i32 = arith.constant 0 : i32
    %c0_i32_0 = arith.constant 0 : i32
    return %arg0, %c0_i32 : i32, i32
  }
  func.func @transform_3(%arg0: i32) -> (i32, i32) {
    %c0_i32 = arith.constant 0 : i32
    %c0_i32_0 = arith.constant 0 : i32
    return %arg0, %c0_i32 : i32, i32
  }
}

</mosaic_0001>

<llo_original>
// kernel: tpu_custom_call.1
$region0: #{tpu_custom_call.1}
  #allocation0 [shape = 'u32[]', space=smem, size = 0x4, offset = 0x4, fixed_abs, tag = 'smem constant byte address 0x4 - core index']
  #allocation1 [shape = 'u32[72,128]{1,0:T(1,128)}', space=vmem, size = 0x9000, scoped, tag = 'internal scratch']
  %s0 = inlined_call_operand.hbm [shape: f32[64,128], index: 0, kind: input, shape index: {}]
  %s1 = inlined_call_operand.hbm [shape: f32[64,128], index: 1, kind: input, shape index: {}]
  %s2 = inlined_call_operand.hbm [shape: f32[64,1024], index: 2, kind: input, shape index: {}]
  %s3 = inlined_call_operand.hbm [shape: f32[64,1024], index: 3, kind: output, shape index: {}]
  %s4 = sld [smem:[#allocation0]]
  $region57: #{tpu_custom_call.1} parent=0
    _
  %s6 = ssub.s32 1, %s4
  %s7 = scalar_select 0, %s6, %s4
  $region1: #{tpu_custom_call.1} parent=0
    #allocation2 [shape = 'u8[32768]{0}', space=vmem, size = 0x8000, scoped, tag = 'input window, operand 0']
    #allocation3 [shape = 's32[2]{0}', space=sflag, size = 0x8, scoped, tag = 'scoped memory for tpu_custom_call.1']
    #allocation4 [shape = 's32[2]{0}', space=sflag, size = 0x8, scoped, tag = 'scoped memory for tpu_custom_call.1']
    #allocation5 [shape = 'u8[32768]{0}', space=vmem, size = 0x8000, scoped, tag = 'input window, operand 1']
    #allocation6 [shape = 's32[2]{0}', space=sflag, size = 0x8, scoped, tag = 'scoped memory for tpu_custom_call.1']
    #allocation7 [shape = 'u8[262144]{0}', space=vmem, size = 0x40000, scoped, tag = 'input window, operand 2']
    #allocation8 [shape = 'u8[262144]{0}', space=vmem, size = 0x40000, scoped, tag = 'output window, operand 0']
    %8 = vsyncpa [#allocation3], 0
    %s9 = scalar_lea.sflag [#allocation3], 1
    %10 = vsyncpa %s9, 0
    %11 = vsyncpa [#allocation6], 0
    %s12 = scalar_lea.sflag [#allocation6], 1
    %13 = vsyncpa %s12, 0
    %14 = vsyncpa [#allocation4], 0
    %s15 = scalar_lea.sflag [#allocation4], 1
    %16 = vsyncpa %s15, 0
    loop: start=0, step=1, limit=4
    $region2: #{tpu_custom_call.1} parent=1 // loop_pre_header
      _
    $region3: #{tpu_custom_call.1} parent=1 // loop_header
      %s18 = sphi 0, %s22
      %p19 = scmp.ge.s32.totalorder %s18, 4
      %s28 = sphi 0, %s30
      %s31 = sphi 0, %s28
      %s32 = sphi 0, %s31
      %s48 = sphi 0, %s32
      %s54 = sphi 0, %s56
      %s57 = sphi 0, %s54
      %s58 = sphi 0, %s57
      %s74 = sphi 0, %s58
      %s80 = sphi 0, %s82
      %s83 = sphi 0, %s80
      %s84 = sphi 0, %s83
      %s100 = sphi 0, %s84
      %s106 = sphi 0, %s108
      %s109 = sphi 0, %s106
      %s110 = sphi 0, %s109
      %s126 = sphi 0, %s110
    $region4: #{tpu_custom_call.1} parent=1 // loop_header_branch
      %21 = sbr.rel (%p19) target = $region8
    $region5: #{tpu_custom_call.1} parent=1 // loop_body
      %s23 = ssub.s32 %s18, 1
      %s24 = ssub.s32 %s18, 2
      %s25 = sadd.s32 %s18, 1
      %s26 = ssub.s32 %s18, %s25
      %p27 = scmp.eq.s32.totalorder %s26, 0
      %s29 = sadd.s32 %s28, 1
      %s30 = scalar_select %p27, %s28, %s29
      %p33 = pneg %p27
      %p34 = scmp.eq.s32.totalorder %s18, 1
      %p35 = por %p33, %p34
      %p36 = scmp.ne.s32.totalorder %s28, %s31
      %p37 = scmp.eq.s32.totalorder %s18, 0
      %p38 = por %p36, %p37
      %p39 = scmp.ne.s32.totalorder %s28, %s31
      %p40 = scmp.eq.s32.totalorder %s23, 1
      %p41 = por %p39, %p40
      %p42 = scmp.ne.s32.totalorder %s31, %s32
      %p43 = scmp.eq.s32.totalorder %s23, 0
      %p44 = por %p42, %p43
      %p45 = scmp.ne.s32.totalorder %s31, %s32
      %p46 = scmp.eq.s32.totalorder %s24, 1
      %p47 = por %p45, %p46
      %p49 = scmp.ne.s32.totalorder %s32, %s48
      %p50 = scmp.eq.s32.totalorder %s24, 0
      %p51 = por %p49, %p50
      %s52 = ssub.s32 %s18, %s25
      %p53 = scmp.eq.s32.totalorder %s52, 0
      %s55 = sadd.s32 %s54, 1
      %s56 = scalar_select %p53, %s54, %s55
      %p59 = pneg %p53
      %p60 = scmp.eq.s32.totalorder %s18, 1
      %p61 = por %p59, %p60
      %p62 = scmp.ne.s32.totalorder %s54, %s57
      %p63 = scmp.eq.s32.totalorder %s18, 0
      %p64 = por %p62, %p63
      %p65 = scmp.ne.s32.totalorder %s54, %s57
      %p66 = scmp.eq.s32.totalorder %s23, 1
      %p67 = por %p65, %p66
      %p68 = scmp.ne.s32.totalorder %s57, %s58
      %p69 = scmp.eq.s32.totalorder %s23, 0
      %p70 = por %p68, %p69
      %p71 = scmp.ne.s32.totalorder %s57, %s58
      %p72 = scmp.eq.s32.totalorder %s24, 1
      %p73 = por %p71, %p72
      %p75 = scmp.ne.s32.totalorder %s58, %s74
      %p76 = scmp.eq.s32.totalorder %s24, 0
      %p77 = por %p75, %p76
      %s78 = ssub.s32 %s18, %s25
      %p79 = scmp.eq.s32.totalorder %s78, 0
      %s81 = sadd.s32 %s80, 1
      %s82 = scalar_select %p79, %s80, %s81
      %p85 = pneg %p79
      %p86 = scmp.eq.s32.totalorder %s18, 1
      %p87 = por %p85, %p86
      %p88 = scmp.ne.s32.totalorder %s80, %s83
      %p89 = scmp.eq.s32.totalorder %s18, 0
      %p90 = por %p88, %p89
      %p91 = scmp.ne.s32.totalorder %s80, %s83
      %p92 = scmp.eq.s32.totalorder %s23, 1
      %p93 = por %p91, %p92
      %p94 = scmp.ne.s32.totalorder %s83, %s84
      %p95 = scmp.eq.s32.totalorder %s23, 0
      %p96 = por %p94, %p95
      %p97 = scmp.ne.s32.totalorder %s83, %s84
      %p98 = scmp.eq.s32.totalorder %s24, 1
      %p99 = por %p97, %p98
      %p101 = scmp.ne.s32.totalorder %s84, %s100
      %p102 = scmp.eq.s32.totalorder %s24, 0
      %p103 = por %p101, %p102
      %s104 = ssub.s32 %s18, %s25
      %p105 = scmp.eq.s32.totalorder %s104, 0
      %s107 = sadd.s32 %s106, 1
      %s108 = scalar_select %p105, %s106, %s107
      %p111 = pneg %p105
      %p112 = scmp.eq.s32.totalorder %s18, 1
      %p113 = por %p111, %p112
      %p114 = scmp.ne.s32.totalorder %s106, %s109
      %p115 = scmp.eq.s32.totalorder %s18, 0
      %p116 = por %p114, %p115
      %p117 = scmp.ne.s32.totalorder %s106, %s109
      %p118 = scmp.eq.s32.totalorder %s23, 1
      %p119 = por %p117, %p118
      %p120 = scmp.ne.s32.totalorder %s109, %s110
      %p121 = scmp.eq.s32.totalorder %s23, 0
      %p122 = por %p120, %p121
      %p123 = scmp.ne.s32.totalorder %s109, %s110
      %p124 = scmp.eq.s32.totalorder %s24, 1
      %p125 = por %p123, %p124
      %p127 = scmp.ne.s32.totalorder %s110, %s126
      %p128 = scmp.eq.s32.totalorder %s24, 0
      %p129 = por %p127, %p128
      %p130 = scmp.le.s32.totalorder 1, %s18
      %p131 = scmp.lt.s32.totalorder %s18, 3
      %p132 = pnand %p130, %p131
      %p133 = pneg %p132
      // Predicated region
      $region9: #{tpu_custom_call.1} parent=5 // pred_check
        _
      $region10: #{tpu_custom_call.1} parent=5 // pred_check_branch
        %135 = sbr.rel (%p132) target = $region12
      $region11: #{tpu_custom_call.1} parent=5 // pred_region
        %s136 = ssub.s32 %s18, 1
      $region12: #{tpu_custom_call.1} parent=5 // pred_fallthru
        _
      %p137 = scmp.lt.s32.totalorder %s18, 2
      // Predicated region
      $region13: #{tpu_custom_call.1} parent=5 // pred_check
        %p138 = pneg %p137
      $region14: #{tpu_custom_call.1} parent=5 // pred_check_branch
        %140 = sbr.rel (%p138) target = $region16
      $region15: #{tpu_custom_call.1} parent=5 // pred_region
        // Predicated region
        $region17: #{tpu_custom_call.1} parent=15 // pred_check
          %p141 = pneg %p38
        $region18: #{tpu_custom_call.1} parent=15 // pred_check_branch
          %143 = sbr.rel (%p141) target = $region20
        $region19: #{tpu_custom_call.1} parent=15 // pred_region
          %s144 = sand.u32 %s28, 1
          %s145 = scalar_lea.sflag [#allocation3], %s144
          %s146 = sand.u32 %s28, 1
          %s147 = smul.addr %s146, 32
          %s148 = scalar_lea.vmem [#allocation2], %s147
          %s149 = smul.u32 4, %s18
          %151 = vsyncadd %s145, 0
          %s152 = smul.addr %s149, 8
          %s153 = scalar_lea.hbm %s0, %s152
          %s154 = sshll.u32 %s153, 4
          %s155 = int_to_ptr.hbm [resolvable:$true] %s154
          %s156 = sshll.u32 %s148, 4
          %s157 = int_to_ptr.vmem [resolvable:$true] %s156
          %162 = dma.hbm_to_vmem [thread:$0]  %s155, 512, %s157, %s145, 128, 128, 8
        $region20: #{tpu_custom_call.1} parent=15 // pred_fallthru
          _
        // Predicated region
        $region21: #{tpu_custom_call.1} parent=15 // pred_check
          %p163 = pneg %p64
        $region22: #{tpu_custom_call.1} parent=15 // pred_check_branch
          %165 = sbr.rel (%p163) target = $region24
        $region23: #{tpu_custom_call.1} parent=15 // pred_region
          %s166 = sand.u32 %s18, 1
          %s167 = scalar_lea.sflag [#allocation6], %s166
          %s168 = sand.u32 %s54, 1
          %s169 = smul.addr %s168, 32
          %s170 = scalar_lea.vmem [#allocation5], %s169
          %s171 = smul.u32 4, %s18
          %173 = vsyncadd %s167, 0
          %s174 = smul.addr %s171, 8
          %s175 = scalar_lea.hbm %s1, %s174
          %s176 = sshll.u32 %s175, 4
          %s177 = int_to_ptr.hbm [resolvable:$true] %s176
          %s178 = sshll.u32 %s170, 4
          %s179 = int_to_ptr.vmem [resolvable:$true] %s178
          %184 = dma.hbm_to_vmem [thread:$0]  %s177, 512, %s179, %s167, 128, 128, 8
        $region24: #{tpu_custom_call.1} parent=15 // pred_fallthru
          _
        // Predicated region
        $region25: #{tpu_custom_call.1} parent=15 // pred_check
          %p185 = pneg %p90
        $region26: #{tpu_custom_call.1} parent=15 // pred_check_branch
          %187 = sbr.rel (%p185) target = $region28
        $region27: #{tpu_custom_call.1} parent=15 // pred_region
          %s188 = sand.u32 %s18, 1
          %s189 = scalar_lea.sflag [#allocation6], %s188
          %s190 = sand.u32 %s80, 1
          %s191 = smul.addr %s190, 256
          %s192 = scalar_lea.vmem [#allocation7], %s191
          %s193 = smul.u32 4, %s18
          %195 = vsyncadd %s189, 0
          %s196 = smul.addr %s193, 8
          %s197 = smul.addr %s196, 8
          %s198 = scalar_lea.hbm %s2, %s197
          %s199 = sshll.u32 %s198, 4
          %s200 = int_to_ptr.hbm [resolvable:$true] %s199
          %s201 = sshll.u32 %s192, 4
          %s202 = int_to_ptr.vmem [resolvable:$true] %s201
          %207 = dma.hbm_to_vmem [thread:$0]  %s200, 4096, %s202, %s189, 1024, 1024, 64
        $region28: #{tpu_custom_call.1} parent=15 // pred_fallthru
          _
      $region16: #{tpu_custom_call.1} parent=5 // pred_fallthru
        _
      %p208 = scmp.le.s32.totalorder 1, %s18
      %p209 = scmp.lt.s32.totalorder %s18, 3
      %p210 = pnand %p208, %p209
      %p211 = pneg %p210
      // Predicated region
      $region29: #{tpu_custom_call.1} parent=5 // pred_check
        _
      $region30: #{tpu_custom_call.1} parent=5 // pred_check_branch
        %213 = sbr.rel (%p210) target = $region32
      $region31: #{tpu_custom_call.1} parent=5 // pred_region
        %s214 = ssub.s32 %s18, 1
        %s215 = sand.u32 %s31, 1
        %s216 = scalar_lea.sflag [#allocation3], %s215
        %s217 = sand.u32 %s31, 1
        %s218 = smul.addr %s217, 32
        %s219 = scalar_lea.vmem [#allocation2], %s218
        // Predicated region
        $region33: #{tpu_custom_call.1} parent=31 // pred_check
          %p220 = pneg %p44
        $region34: #{tpu_custom_call.1} parent=31 // pred_check_branch
          %222 = sbr.rel (%p220) target = $region36
        $region35: #{tpu_custom_call.1} parent=31 // pred_region
          %224 = dma.done %s216, 512
        $region36: #{tpu_custom_call.1} parent=31 // pred_fallthru
          _
        %s225 = sand.u32 %s23, 1
        %s226 = scalar_lea.sflag [#allocation6], %s225
        %s227 = sand.u32 %s57, 1
        %s228 = smul.addr %s227, 32
        %s229 = scalar_lea.vmem [#allocation5], %s228
        // Predicated region
        $region37: #{tpu_custom_call.1} parent=31 // pred_check
          %p230 = pneg %p70
        $region38: #{tpu_custom_call.1} parent=31 // pred_check_branch
          %232 = sbr.rel (%p230) target = $region40
        $region39: #{tpu_custom_call.1} parent=31 // pred_region
          %234 = dma.done %s226, 512
        $region40: #{tpu_custom_call.1} parent=31 // pred_fallthru
          _
        %s235 = sand.u32 %s23, 1
        %s236 = scalar_lea.sflag [#allocation6], %s235
        %s237 = sand.u32 %s83, 1
        %s238 = smul.addr %s237, 256
        %s239 = scalar_lea.vmem [#allocation7], %s238
        // Predicated region
        $region41: #{tpu_custom_call.1} parent=31 // pred_check
          %p240 = pneg %p96
        $region42: #{tpu_custom_call.1} parent=31 // pred_check_branch
          %242 = sbr.rel (%p240) target = $region44
        $region43: #{tpu_custom_call.1} parent=31 // pred_region
          %244 = dma.done %s236, 4096
        $region44: #{tpu_custom_call.1} parent=31 // pred_fallthru
          _
        %s245 = sand.u32 %s31, 1
        %s246 = scalar_lea.sflag [#allocation3], %s245
        %s247 = sand.u32 %s31, 1
        %s248 = smul.addr %s247, 32
        %s249 = scalar_lea.vmem [#allocation2], %s248
        %p250 = pneg %p44
        %p251 = pneg %p41
        %s252 = sand.u32 %s23, 1
        %s253 = scalar_lea.sflag [#allocation6], %s252
        %s254 = sand.u32 %s57, 1
        %s255 = smul.addr %s254, 32
        %s256 = scalar_lea.vmem [#allocation5], %s255
        %p257 = pneg %p70
        %p258 = pneg %p67
        %s259 = sand.u32 %s23, 1
        %s260 = scalar_lea.sflag [#allocation6], %s259
        %s261 = sand.u32 %s83, 1
        %s262 = smul.addr %s261, 256
        %s263 = scalar_lea.vmem [#allocation7], %s262
        %p264 = pneg %p96
        %p265 = pneg %p93
        %p266 = pneg %p122
        %p267 = pneg %p119
        %s268 = sand.u32 %s109, 1
        %s269 = scalar_lea.sflag [#allocation4], %s268
        %s270 = sand.u32 %s109, 1
        %s271 = smul.addr %s270, 256
        %s272 = scalar_lea.vmem [#allocation8], %s271
        %s273 = smul.u32 4, %s23
        %s274 = smul.u32 4, %s23
        %s275 = smul.u32 4, %s23
        %s276 = smul.u32 4, %s23
        %v277 = vld [vmem:[%s229] sm:$0xff]
        %v278 = vld [vmem:[%s229 + $0x8] sm:$0xff]
        %v279 = vld [vmem:[%s229 + $0x10] sm:$0xff]
        %v280 = vld [vmem:[%s229 + $0x18] sm:$0xff]
        %v281 = vrsqrt.pop %v277
        %v282 = vmul.f32 %v281, %v277
        %v283 = vmul.f32 %v282, %v281
        %v284 = vmul.f32 0.5, %v283
        %v285 = vsub.f32 1.5, %v284
        %v286 = vmul.f32 %v281, %v285
        %v287 = vmul.f32 %v277, %v286
        %vm288 = vcmp.eq.f32.partialorder %v277, inf
        %v289 = vsel %vm288, %v277, %v287
        %vm290 = vcmp.eq.f32.partialorder %v277, 0.0
        %v291 = vand.u32 %v277, 2147483648
        %v292 = vsel %vm290, %v291, %v289
        %v293 = vrsqrt.pop %v278
        %v294 = vmul.f32 %v293, %v278
        %v295 = vmul.f32 %v294, %v293
        %v296 = vmul.f32 0.5, %v295
        %v297 = vsub.f32 1.5, %v296
        %v298 = vmul.f32 %v293, %v297
        %v299 = vmul.f32 %v278, %v298
        %vm300 = vcmp.eq.f32.partialorder %v278, inf
        %v301 = vsel %vm300, %v278, %v299
        %vm302 = vcmp.eq.f32.partialorder %v278, 0.0
        %v303 = vand.u32 %v278, 2147483648
        %v304 = vsel %vm302, %v303, %v301
        %v305 = vrsqrt.pop %v279
        %v306 = vmul.f32 %v305, %v279
        %v307 = vmul.f32 %v306, %v305
        %v308 = vmul.f32 0.5, %v307
        %v309 = vsub.f32 1.5, %v308
        %v310 = vmul.f32 %v305, %v309
        %v311 = vmul.f32 %v279, %v310
        %vm312 = vcmp.eq.f32.partialorder %v279, inf
        %v313 = vsel %vm312, %v279, %v311
        %vm314 = vcmp.eq.f32.partialorder %v279, 0.0
        %v315 = vand.u32 %v279, 2147483648
        %v316 = vsel %vm314, %v315, %v313
        %v317 = vrsqrt.pop %v280
        %v318 = vmul.f32 %v317, %v280
        %v319 = vmul.f32 %v318, %v317
        %v320 = vmul.f32 0.5, %v319
        %v321 = vsub.f32 1.5, %v320
        %v322 = vmul.f32 %v317, %v321
        %v323 = vmul.f32 %v280, %v322
        %vm324 = vcmp.eq.f32.partialorder %v280, inf
        %v325 = vsel %vm324, %v280, %v323
        %vm326 = vcmp.eq.f32.partialorder %v280, 0.0
        %v327 = vand.u32 %v280, 2147483648
        %v328 = vsel %vm326, %v327, %v325
        %v329 = vld [vmem:[%s219] sm:$0xff]
        %v330 = vld [vmem:[%s219 + $0x8] sm:$0xff]
        %v331 = vld [vmem:[%s219 + $0x10] sm:$0xff]
        %v332 = vld [vmem:[%s219 + $0x18] sm:$0xff]
        %v333 = vld [vmem:[%s239] sm:$0xff]
        %v334 = vld [vmem:[%s239 + $0x8] sm:$0xff]
        %v335 = vld [vmem:[%s239 + $0x10] sm:$0xff]
        %v336 = vld [vmem:[%s239 + $0x18] sm:$0xff]
        %v337 = vld [vmem:[%s239 + $0x20] sm:$0xff]
        %v338 = vld [vmem:[%s239 + $0x28] sm:$0xff]
        %v339 = vld [vmem:[%s239 + $0x30] sm:$0xff]
        %v340 = vld [vmem:[%s239 + $0x38] sm:$0xff]
        %v341 = vld [vmem:[%s239 + $0x40] sm:$0xff]
        %v342 = vld [vmem:[%s239 + $0x48] sm:$0xff]
        %v343 = vld [vmem:[%s239 + $0x50] sm:$0xff]
        %v344 = vld [vmem:[%s239 + $0x58] sm:$0xff]
        %v345 = vld [vmem:[%s239 + $0x60] sm:$0xff]
        %v346 = vld [vmem:[%s239 + $0x68] sm:$0xff]
        %v347 = vld [vmem:[%s239 + $0x70] sm:$0xff]
        %v348 = vld [vmem:[%s239 + $0x78] sm:$0xff]
        %v349 = vld [vmem:[%s239 + $0x80] sm:$0xff]
        %v350 = vld [vmem:[%s239 + $0x88] sm:$0xff]
        %v351 = vld [vmem:[%s239 + $0x90] sm:$0xff]
        %v352 = vld [vmem:[%s239 + $0x98] sm:$0xff]
        %v353 = vld [vmem:[%s239 + $0xa0] sm:$0xff]
        %v354 = vld [vmem:[%s239 + $0xa8] sm:$0xff]
        %v355 = vld [vmem:[%s239 + $0xb0] sm:$0xff]
        %v356 = vld [vmem:[%s239 + $0xb8] sm:$0xff]
        %v357 = vld [vmem:[%s239 + $0xc0] sm:$0xff]
        %v358 = vld [vmem:[%s239 + $0xc8] sm:$0xff]
        %v359 = vld [vmem:[%s239 + $0xd0] sm:$0xff]
        %v360 = vld [vmem:[%s239 + $0xd8] sm:$0xff]
        %v361 = vld [vmem:[%s239 + $0xe0] sm:$0xff]
        %v362 = vld [vmem:[%s239 + $0xe8] sm:$0xff]
        %v363 = vld [vmem:[%s239 + $0xf0] sm:$0xff]
        %v364 = vld [vmem:[%s239 + $0xf8] sm:$0xff]
        %v365 = vmul.f32 %v333, %v292
        %v366 = vmul.f32 %v334, %v292
        %v367 = vmul.f32 %v335, %v292
        %v368 = vmul.f32 %v336, %v292
        %v369 = vmul.f32 %v337, %v292
        %v370 = vmul.f32 %v338, %v292
        %v371 = vmul.f32 %v339, %v292
        %v372 = vmul.f32 %v340, %v292
        %v373 = vmul.f32 %v341, %v304
        %v374 = vmul.f32 %v342, %v304
        %v375 = vmul.f32 %v343, %v304
        %v376 = vmul.f32 %v344, %v304
        %v377 = vmul.f32 %v345, %v304
        %v378 = vmul.f32 %v346, %v304
        %v379 = vmul.f32 %v347, %v304
        %v380 = vmul.f32 %v348, %v304
        %v381 = vmul.f32 %v349, %v316
        %v382 = vmul.f32 %v350, %v316
        %v383 = vmul.f32 %v351, %v316
        %v384 = vmul.f32 %v352, %v316
        %v385 = vmul.f32 %v353, %v316
        %v386 = vmul.f32 %v354, %v316
        %v387 = vmul.f32 %v355, %v316
        %v388 = vmul.f32 %v356, %v316
        %v389 = vmul.f32 %v357, %v328
        %v390 = vmul.f32 %v358, %v328
        %v391 = vmul.f32 %v359, %v328
        %v392 = vmul.f32 %v360, %v328
        %v393 = vmul.f32 %v361, %v328
        %v394 = vmul.f32 %v362, %v328
        %v395 = vmul.f32 %v363, %v328
        %v396 = vmul.f32 %v364, %v328
        %v397 = vadd.f32 %v329, %v365
        %v398 = vadd.f32 %v329, %v366
        %v399 = vadd.f32 %v329, %v367
        %v400 = vadd.f32 %v329, %v368
        %v401 = vadd.f32 %v329, %v369
        %v402 = vadd.f32 %v329, %v370
        %v403 = vadd.f32 %v329, %v371
        %v404 = vadd.f32 %v329, %v372
        %v405 = vadd.f32 %v330, %v373
        %v406 = vadd.f32 %v330, %v374
        %v407 = vadd.f32 %v330, %v375
        %v408 = vadd.f32 %v330, %v376
        %v409 = vadd.f32 %v330, %v377
        %v410 = vadd.f32 %v330, %v378
        %v411 = vadd.f32 %v330, %v379
        %v412 = vadd.f32 %v330, %v380
        %v413 = vadd.f32 %v331, %v381
        %v414 = vadd.f32 %v331, %v382
        %v415 = vadd.f32 %v331, %v383
        %v416 = vadd.f32 %v331, %v384
        %v417 = vadd.f32 %v331, %v385
        %v418 = vadd.f32 %v331, %v386
        %v419 = vadd.f32 %v331, %v387
        %v420 = vadd.f32 %v331, %v388
        %v421 = vadd.f32 %v332, %v389
        %v422 = vadd.f32 %v332, %v390
        %v423 = vadd.f32 %v332, %v391
        %v424 = vadd.f32 %v332, %v392
        %v425 = vadd.f32 %v332, %v393
        %v426 = vadd.f32 %v332, %v394
        %v427 = vadd.f32 %v332, %v395
        %v428 = vadd.f32 %v332, %v396
        %429 = vst [vmem:[%s272] sm:$0xff] %v397
        %430 = vst [vmem:[%s272 + $0x8] sm:$0xff] %v398
        %431 = vst [vmem:[%s272 + $0x10] sm:$0xff] %v399
        %432 = vst [vmem:[%s272 + $0x18] sm:$0xff] %v400
        %433 = vst [vmem:[%s272 + $0x20] sm:$0xff] %v401
        %434 = vst [vmem:[%s272 + $0x28] sm:$0xff] %v402
        %435 = vst [vmem:[%s272 + $0x30] sm:$0xff] %v403
        %436 = vst [vmem:[%s272 + $0x38] sm:$0xff] %v404
        %437 = vst [vmem:[%s272 + $0x40] sm:$0xff] %v405
        %438 = vst [vmem:[%s272 + $0x48] sm:$0xff] %v406
        %439 = vst [vmem:[%s272 + $0x50] sm:$0xff] %v407
        %440 = vst [vmem:[%s272 + $0x58] sm:$0xff] %v408
        %441 = vst [vmem:[%s272 + $0x60] sm:$0xff] %v409
        %442 = vst [vmem:[%s272 + $0x68] sm:$0xff] %v410
        %443 = vst [vmem:[%s272 + $0x70] sm:$0xff] %v411
        %444 = vst [vmem:[%s272 + $0x78] sm:$0xff] %v412
        %445 = vst [vmem:[%s272 + $0x80] sm:$0xff] %v413
        %446 = vst [vmem:[%s272 + $0x88] sm:$0xff] %v414
        %447 = vst [vmem:[%s272 + $0x90] sm:$0xff] %v415
        %448 = vst [vmem:[%s272 + $0x98] sm:$0xff] %v416
        %449 = vst [vmem:[%s272 + $0xa0] sm:$0xff] %v417
        %450 = vst [vmem:[%s272 + $0xa8] sm:$0xff] %v418
        %451 = vst [vmem:[%s272 + $0xb0] sm:$0xff] %v419
        %452 = vst [vmem:[%s272 + $0xb8] sm:$0xff] %v420
        %453 = vst [vmem:[%s272 + $0xc0] sm:$0xff] %v421
        %454 = vst [vmem:[%s272 + $0xc8] sm:$0xff] %v422
        %455 = vst [vmem:[%s272 + $0xd0] sm:$0xff] %v423
        %456 = vst [vmem:[%s272 + $0xd8] sm:$0xff] %v424
        %457 = vst [vmem:[%s272 + $0xe0] sm:$0xff] %v425
        %458 = vst [vmem:[%s272 + $0xe8] sm:$0xff] %v426
        %459 = vst [vmem:[%s272 + $0xf0] sm:$0xff] %v427
        %460 = vst [vmem:[%s272 + $0xf8] sm:$0xff] %v428
        %s461 = sand.u32 %s109, 1
        %s462 = scalar_lea.sflag [#allocation4], %s461
        %s463 = sand.u32 %s109, 1
        %s464 = smul.addr %s463, 256
        %s465 = scalar_lea.vmem [#allocation8], %s464
        // Predicated region
        $region45: #{tpu_custom_call.1} parent=31 // pred_check
          %p466 = pneg %p119
        $region46: #{tpu_custom_call.1} parent=31 // pred_check_branch
          %468 = sbr.rel (%p466) target = $region48
        $region47: #{tpu_custom_call.1} parent=31 // pred_region
          %s469 = smul.u32 4, %s23
          %471 = vsyncadd %s462, 0
          %s472 = smul.addr %s469, 8
          %s473 = smul.addr %s472, 8
          %s474 = scalar_lea.hbm %s3, %s473
          %s475 = sshll.u32 %s465, 4
          %s476 = int_to_ptr.vmem [resolvable:$true] %s475
          %s477 = sshll.u32 %s474, 4
          %s478 = int_to_ptr.hbm [resolvable:$true] %s477
          %483 = dma.vmem_to_hbm [thread:$0]  %s476, 4096, %s478, %s462, 1024, 1024, 64
        $region48: #{tpu_custom_call.1} parent=31 // pred_fallthru
          _
      $region32: #{tpu_custom_call.1} parent=5 // pred_fallthru
        _
      %p484 = scmp.le.s32.totalorder 2, %s18
      // Predicated region
      $region49: #{tpu_custom_call.1} parent=5 // pred_check
        %p485 = pneg %p484
      $region50: #{tpu_custom_call.1} parent=5 // pred_check_branch
        %487 = sbr.rel (%p485) target = $region52
      $region51: #{tpu_custom_call.1} parent=5 // pred_region
        %s488 = ssub.s32 %s18, 2
        // Predicated region
        $region53: #{tpu_custom_call.1} parent=51 // pred_check
          %p489 = pneg %p125
        $region54: #{tpu_custom_call.1} parent=51 // pred_check_branch
          %491 = sbr.rel (%p489) target = $region56
        $region55: #{tpu_custom_call.1} parent=51 // pred_region
          %s492 = sand.u32 %s110, 1
          %s493 = scalar_lea.sflag [#allocation4], %s492
          %s494 = sand.u32 %s110, 1
          %s495 = smul.addr %s494, 256
          %s496 = scalar_lea.vmem [#allocation8], %s495
          %498 = dma.done %s493, 4096
        $region56: #{tpu_custom_call.1} parent=51 // pred_fallthru
          _
      $region52: #{tpu_custom_call.1} parent=5 // pred_fallthru
        _
    $region6: #{tpu_custom_call.1} parent=1 // loop_footer
      %s22 = sadd.s32 1, %s18
    $region7: #{tpu_custom_call.1} parent=1 // loop_footer_branch
      %17 = sbr.rel target = $region3
    $region8: #{tpu_custom_call.1} parent=1 // loop_exit
      _
    %499 = vsyncpa [#allocation3], 1
    %s500 = scalar_lea.sflag [#allocation3], 1
    %501 = vsyncpa %s500, 1
    %502 = vsyncpa [#allocation6], 1
    %s503 = scalar_lea.sflag [#allocation6], 1
    %504 = vsyncpa %s503, 1
    %505 = vsyncpa [#allocation4], 1
    %s506 = scalar_lea.sflag [#allocation4], 1
    %507 = vsyncpa %s506, 1

</llo_original>
